<compile_context>
chip_gen: v7x
topology: tpu7x:2x2x1
jax: 0.10.0
libtpu: 0.0.40
codegen_flags: <defaults>
</compile_context>

<pallas_src>
import functools

import jax
import jax.numpy as jnp
from jax.experimental import pallas as pl
from jax.experimental.pallas import tpu as pltpu


# ---------------------------------------------------------------------------
# 1-D interpolation weights (PyTorch semantics), built with iota compares.
# ---------------------------------------------------------------------------
def _linear_weights(out_size: int, in_size: int) -> jnp.ndarray:
    """1-D bilinear weights, PyTorch align_corners=False semantics."""
    scale = in_size / out_size
    dst = jnp.arange(out_size, dtype=jnp.float32)
    src = jnp.maximum((dst + 0.5) * scale - 0.5, 0.0)   # PyTorch clamps negatives
    i0 = jnp.minimum(jnp.floor(src).astype(jnp.int32), in_size - 1)
    i1 = jnp.minimum(i0 + 1, in_size - 1)
    lam1 = src - i0.astype(jnp.float32)
    lam0 = 1.0 - lam1
    cols = jnp.arange(in_size, dtype=jnp.int32)[None, :]          # (1, in)
    w = (jnp.where(cols == i0[:, None], lam0[:, None], 0.0)
         + jnp.where(cols == i1[:, None], lam1[:, None], 0.0))
    return w.astype(jnp.float32)                                   # (out, in)


def _nearest_weights(out_size: int, in_size: int) -> jnp.ndarray:
    """1-D nearest weights, PyTorch mode='nearest' semantics."""
    scale = in_size / out_size
    dst = jnp.arange(out_size, dtype=jnp.float32)
    idx = jnp.minimum(jnp.floor(dst * scale).astype(jnp.int32), in_size - 1)
    cols = jnp.arange(in_size, dtype=jnp.int32)[None, :]
    return jnp.where(cols == idx[:, None], 1.0, 0.0).astype(jnp.float32)


def _block_diag(w: jnp.ndarray, b: int) -> jnp.ndarray:
    """(W_in, W_out) -> block-diagonal (b*W_in, b*W_out)."""
    w_in, w_out = w.shape
    eye = jnp.eye(b, dtype=w.dtype)
    bd = eye[:, None, :, None] * w[None, :, None, :]               # (b,W_in,b,W_out)
    return bd.reshape(b * w_in, b * w_out)


# ---------------------------------------------------------------------------
# Plane-batch selection (static, Python ints only).
# ---------------------------------------------------------------------------
def _pick_plane_batch(nc, w_in, w_out, h_in, h_out, itemsize):
    """Largest divisor B of nc such that:
       * B*max(W_in, W_out) stays within a couple of MXU tiles (bounds the
         block-diagonal weight size / wasted MACs),
       * per-step double-buffered blocks + weights fit comfortably in VMEM,
       * grid extent nc//B >= 2 when possible (keeps both v7x TCs busy).
    """
    vmem_budget = 40 << 20          # headroom under the 48 MiB scoped limit below
    cap = max(1, 512 // max(w_in, w_out, 1))

    def fits(b):
        wwbd = (b * w_in) * (b * w_out) * 4
        wh = h_out * h_in * 4
        x_blk = h_in * (b * w_in) * itemsize
        o_blk = h_out * (b * w_out) * itemsize
        interm = (h_in + h_out) * (b * w_out) * 4
        return 2 * (wwbd + wh + x_blk + o_blk) + interm <= vmem_budget

    feasible = [b for b in range(1, nc + 1) if nc % b == 0 and b <= cap and fits(b)]
    multi = [b for b in feasible if nc // b >= 2]
    if multi:
        return max(multi)
    return max(feasible) if feasible else 1
    # TODO(synk): for planes so large that even B=1 exceeds the v7x VMEM budget,
    # add a spatial (H_out-band) grid axis instead of relying on B=1.


# ---------------------------------------------------------------------------
# Kernel: two plain 2-D MXU matmuls per grid step, no in-kernel relayout.
# ---------------------------------------------------------------------------
def _interp_kernel(wh_ref, wwbd_ref, x_ref, o_ref):
    # wh_ref   : (H_out, H_in)
    # wwbd_ref : (B*W_in, B*W_out)   block-diagonal width weights
    # x_ref    : (1, H_in, B*W_in)   B planes concatenated along lanes
    # o_ref    : (1, H_out, B*W_out) lane-dense output slab
    x = x_ref[0]                                                    # no upcast
    y = jnp.dot(x, wwbd_ref[...], preferred_element_type=jnp.float32)   # (H_in, B*W_out)
    out = jnp.dot(wh_ref[...], y.astype(wh_ref.dtype),
                  preferred_element_type=jnp.float32)                    # (H_out, B*W_out)
    o_ref[0] = out.astype(o_ref.dtype)


# ---------------------------------------------------------------------------
# Wrapper (layout plumbing in XLA, resize in Pallas).
# ---------------------------------------------------------------------------
@functools.partial(jax.jit, static_argnames=("size", "mode"))
def interpolate(x, size, mode="bilinear"):
    """Equivalent of Interpolate(mode)(x, size) with align_corners=False.

    x: (N, C, H_in, W_in).  size: (H_out, W_out).
    """
    n, c, h_in, w_in = x.shape
    h_out, w_out = size
    nc = n * c

    if mode == "bilinear":
        wh = _linear_weights(h_out, h_in)
        ww = _linear_weights(w_out, w_in)
    elif mode == "nearest":
        # TODO(synk): for very large planes / upsample factors, a gather + 2-tap
        # FMA path would beat the dense-weight matmul; matmul path kept here.
        wh = _nearest_weights(h_out, h_in)
        ww = _nearest_weights(w_out, w_in)
    else:
        # TODO(synk): other F.interpolate modes (bicubic, area, ...) not implemented.
        raise NotImplementedError(f"mode={mode}")

    # bf16 activations -> bf16 weights (native MXU bf16-in/f32-acc);
    # f32 activations keep f32 weights for exactness.
    wdtype = jnp.bfloat16 if x.dtype == jnp.bfloat16 else jnp.float32
    wh = wh.astype(wdtype)
    wwT = ww.T.astype(wdtype)                                       # (W_in, W_out)

    b = _pick_plane_batch(nc, w_in, w_out, h_in, h_out, x.dtype.itemsize)
    t = nc // b
    wwbd = _block_diag(wwT, b)                                      # (b*W_in, b*W_out)

    # Layout plumbing (XLA side): concatenate B planes along the lane (W) axis
    # so the kernel sees lane-dense 2-D slabs and writes unmasked stores.
    x_slab = (x.reshape(t, b, h_in, w_in)
               .transpose(0, 2, 1, 3)
               .reshape(t, h_in, b * w_in))

    out_slab = pl.pallas_call(
        _interp_kernel,
        out_shape=jax.ShapeDtypeStruct((t, h_out, b * w_out), x.dtype),
        grid_spec=pltpu.PrefetchScalarGridSpec(
            num_scalar_prefetch=0,
            grid=(t,),
            in_specs=[
                # Constant-index weight blocks are not re-fetched across steps;
                # the duplicate pipeline buffer is accepted (accounted for in
                # the VMEM budget) to keep the pipeline spec simple/safe.
                pl.BlockSpec((h_out, h_in), lambda i: (0, 0)),            # Wh
                pl.BlockSpec((b * w_in, b * w_out), lambda i: (0, 0)),    # block-diag Ww^T
                pl.BlockSpec((1, h_in, b * w_in), lambda i: (i, 0, 0)),   # x slab
            ],
            out_specs=pl.BlockSpec((1, h_out, b * w_out), lambda i: (i, 0, 0)),
        ),
        compiler_params=pltpu.CompilerParams(
            dimension_semantics=("parallel",),
            vmem_limit_bytes=48 * 1024 * 1024,
        ),
    )(wh, wwbd, x_slab)

    out = (out_slab.reshape(t, h_out, b, w_out)
                   .transpose(0, 2, 1, 3)
                   .reshape(n, c, h_out, w_out))
    return out


if __name__ == "__main__":
    key = jax.random.PRNGKey(0)
    # Small shapes consistent with a U-Net decoder upsample: NCHW.
    x = jax.random.normal(key, (2, 4, 16, 16), dtype=jnp.float32)
    size = (32, 32)

    # Bilinear (align_corners=False) vs jax.image.resize half-pixel bilinear
    # (valid cross-check for upsampling, where no antialiasing is applied).
    out = interpolate(x, size, mode="bilinear")
    out = jax.block_until_ready(out)
    assert out.shape == (2, 4, 32, 32), out.shape
    ref = jax.image.resize(x, (2, 4, 32, 32), method="bilinear")
    assert jnp.allclose(out, ref, atol=1e-5, rtol=1e-5)

    # Nearest vs a direct index-gather reference with PyTorch 'nearest' indices.
    out_n = interpolate(x, size, mode="nearest")
    out_n = jax.block_until_ready(out_n)
    idx = jnp.minimum(jnp.floor(jnp.arange(32) * (16 / 32)).astype(jnp.int32), 15)
    ref_n = x[:, :, idx, :][:, :, :, idx]
    assert out_n.shape == (2, 4, 32, 32), out_n.shape
    assert jnp.allclose(out_n, ref_n)

    print("KERNEL_OK")
</pallas_src>

<mosaic_0001>
module attributes {stable_mosaic.version = 11 : i64} {
  func.func @_interp_kernel(%arg0: i32, %arg1: memref<32x16xf32, #tpu.memory_space<vmem>>, %arg2: memref<64x128xf32, #tpu.memory_space<vmem>>, %arg3: memref<1x16x64xf32, #tpu.memory_space<vmem>>, %arg4: memref<1x32x128xf32, #tpu.memory_space<vmem>>) attributes {dimension_semantics = [#tpu.dimension_semantics<parallel>], iteration_bounds = array<i64: 2>, scalar_prefetch = 0 : i64, scratch_operands = 0 : i64, tpu.core_type = #tpu.core_type<tc>, window_params = [{pipeline_mode = #tpu.pipeline_mode<synchronous>, transform_indices = @transform_0, window_bounds = array<i64: 32, 16>}, {pipeline_mode = #tpu.pipeline_mode<synchronous>, transform_indices = @transform_1, window_bounds = array<i64: 64, 128>}, {transform_indices = @transform_2, window_bounds = array<i64: 1, 16, 64>}, {transform_indices = @transform_3, window_bounds = array<i64: 1, 32, 128>}]} {
    %c0 = arith.constant 0 : index
    %c0_0 = arith.constant 0 : index
    %c0_1 = arith.constant 0 : index
    %0 = vector.load %arg3[%c0, %c0_0, %c0_1] : memref<1x16x64xf32, #tpu.memory_space<vmem>>, vector<1x16x64xf32>
    %1 = vector.shape_cast %0 : vector<1x16x64xf32> to vector<16x64xf32>
    %c0_2 = arith.constant 0 : index
    %c0_3 = arith.constant 0 : index
    %2 = vector.load %arg2[%c0_2, %c0_3] : memref<64x128xf32, #tpu.memory_space<vmem>>, vector<64x128xf32>
    %cst = arith.constant dense<0.000000e+00> : vector<16x128xf32>
    %3 = tpu.matmul %1, %2, %cst {dimension_numbers = #tpu.dot_dimension_numbers<[1], [0], [0], [1], [0, 0, 1, 1], [], []>} : vector<16x64xf32>, vector<64x128xf32>, vector<16x128xf32> -> vector<16x128xf32>
    %c0_4 = arith.constant 0 : index
    %c0_5 = arith.constant 0 : index
    %4 = vector.load %arg1[%c0_4, %c0_5] : memref<32x16xf32, #tpu.memory_space<vmem>>, vector<32x16xf32>
    %cst_6 = arith.constant dense<0.000000e+00> : vector<32x128xf32>
    %5 = tpu.matmul %4, %3, %cst_6 {dimension_numbers = #tpu.dot_dimension_numbers<[1], [0], [0], [1], [0, 0, 1, 1], [], []>} : vector<32x16xf32>, vector<16x128xf32>, vector<32x128xf32> -> vector<32x128xf32>
    %c0_7 = arith.constant 0 : index
    %c0_8 = arith.constant 0 : index
    %c0_9 = arith.constant 0 : index
    %6 = vector.load %arg4[%c0_7, %c0_8, %c0_9] : memref<1x32x128xf32, #tpu.memory_space<vmem>>, vector<1x32x128xf32>
    %7 = vector.shape_cast %6 : vector<1x32x128xf32> to vector<32x128xf32>
    %8 = vector.shape_cast %5 : vector<32x128xf32> to vector<1x32x128xf32>
    tpu.vector_store %arg4[%c0_7, %c0_8, %c0_9], %8 {strides = array<i32>} : memref<1x32x128xf32, #tpu.memory_space<vmem>>, vector<1x32x128xf32>,
    return
  }
  func.func @transform_0(%arg0: i32) -> (i32, i32) {
    %c0_i32 = arith.constant 0 : i32
    %c0_i32_0 = arith.constant 0 : i32
    %c0_i32_1 = arith.constant 0 : i32
    return %c0_i32, %c0_i32_0 : i32, i32
  }
  func.func @transform_1(%arg0: i32) -> (i32, i32) {
    %c0_i32 = arith.constant 0 : i32
    %c0_i32_0 = arith.constant 0 : i32
    %c0_i32_1 = arith.constant 0 : i32
    return %c0_i32, %c0_i32_0 : i32, i32
  }
  func.func @transform_2(%arg0: i32) -> (i32, i32, i32) {
    %c0_i32 = arith.constant 0 : i32
    %c0_i32_0 = arith.constant 0 : i32
    %c0_i32_1 = arith.constant 0 : i32
    return %arg0, %c0_i32, %c0_i32_0 : i32, i32, i32
  }
  func.func @transform_3(%arg0: i32) -> (i32, i32, i32) {
    %c0_i32 = arith.constant 0 : i32
    %c0_i32_0 = arith.constant 0 : i32
    %c0_i32_1 = arith.constant 0 : i32
    return %arg0, %c0_i32, %c0_i32_0 : i32, i32, i32
  }
}

</mosaic_0001>

<llo_original>
// kernel: interpolate.1
$region0: #{interpolate.1}
  #allocation0 [shape = 'u32[]', space=smem, size = 0x4, offset = 0x4, fixed_abs, tag = 'smem constant byte address 0x4 - core index']
  #allocation1 [shape = 'u32[144,128]{1,0:T(1,128)}', space=vmem, size = 0x12000, scoped, tag = 'internal scratch']
  %s0 = inlined_call_operand.vmem [shape: f32[32,16], index: 0, kind: input, shape index: {}]
  %s1 = inlined_call_operand.vmem [shape: f32[64,128], index: 1, kind: input, shape index: {}]
  %s2 = inlined_call_operand.vmem [shape: f32[2,16,64], index: 2, kind: input, shape index: {}]
  %s3 = inlined_call_operand.vmem [shape: f32[2,32,128], index: 3, kind: output, shape index: {}]
  %s4 = sld [smem:[#allocation0]]
  $region45: #{interpolate.1} parent=0
    _
  %s6 = ssub.s32 1, %s4
  %s7 = scalar_select 0, %s6, %s4
  loop: start=0, step=1, limit=4
  $region2: #{interpolate.1} parent=0 // loop_pre_header
    _
  $region3: #{interpolate.1} parent=0 // loop_header
    %s9 = sphi 0, %s13
    %p10 = scmp.ge.s32.totalorder %s9, 4
    %s17 = sphi 0, %s17
    %s19 = sphi 0, %s17
    %s20 = sphi 0, %s19
    %s34 = sphi 0, %s20
    %s38 = sphi 0, %s38
    %s40 = sphi 0, %s38
    %s41 = sphi 0, %s40
    %s55 = sphi 0, %s41
    %s61 = sphi 0, %s63
    %s64 = sphi 0, %s61
    %s65 = sphi 0, %s64
    %s81 = sphi 0, %s65
    %s87 = sphi 0, %s89
    %s90 = sphi 0, %s87
    %s91 = sphi 0, %s90
    %s107 = sphi 0, %s91
  $region4: #{interpolate.1} parent=0 // loop_header_branch
    %12 = sbr.rel (%p10) target = $region8
  $region5: #{interpolate.1} parent=0 // loop_body
    %s14 = ssub.s32 %s9, 1
    %s15 = ssub.s32 %s9, 2
    %s16 = sadd.s32 %s9, 1
    %s18 = sadd.s32 %s17, 1
    %p21 = scmp.eq.s32.totalorder %s9, 1
    %p22 = scmp.ne.s32.totalorder %s17, %s19
    %p23 = scmp.eq.s32.totalorder %s9, 0
    %p24 = por %p22, %p23
    %p25 = scmp.ne.s32.totalorder %s17, %s19
    %p26 = scmp.eq.s32.totalorder %s14, 1
    %p27 = por %p25, %p26
    %p28 = scmp.ne.s32.totalorder %s19, %s20
    %p29 = scmp.eq.s32.totalorder %s14, 0
    %p30 = por %p28, %p29
    %p31 = scmp.ne.s32.totalorder %s19, %s20
    %p32 = scmp.eq.s32.totalorder %s15, 1
    %p33 = por %p31, %p32
    %p35 = scmp.ne.s32.totalorder %s20, %s34
    %p36 = scmp.eq.s32.totalorder %s15, 0
    %p37 = por %p35, %p36
    %s39 = sadd.s32 %s38, 1
    %p42 = scmp.eq.s32.totalorder %s9, 1
    %p43 = scmp.ne.s32.totalorder %s38, %s40
    %p44 = scmp.eq.s32.totalorder %s9, 0
    %p45 = por %p43, %p44
    %p46 = scmp.ne.s32.totalorder %s38, %s40
    %p47 = scmp.eq.s32.totalorder %s14, 1
    %p48 = por %p46, %p47
    %p49 = scmp.ne.s32.totalorder %s40, %s41
    %p50 = scmp.eq.s32.totalorder %s14, 0
    %p51 = por %p49, %p50
    %p52 = scmp.ne.s32.totalorder %s40, %s41
    %p53 = scmp.eq.s32.totalorder %s15, 1
    %p54 = por %p52, %p53
    %p56 = scmp.ne.s32.totalorder %s41, %s55
    %p57 = scmp.eq.s32.totalorder %s15, 0
    %p58 = por %p56, %p57
    %s59 = ssub.s32 %s9, %s16
    %p60 = scmp.eq.s32.totalorder %s59, 0
    %s62 = sadd.s32 %s61, 1
    %s63 = scalar_select %p60, %s61, %s62
    %p66 = pneg %p60
    %p67 = scmp.eq.s32.totalorder %s9, 1
    %p68 = por %p66, %p67
    %p69 = scmp.ne.s32.totalorder %s61, %s64
    %p70 = scmp.eq.s32.totalorder %s9, 0
    %p71 = por %p69, %p70
    %p72 = scmp.ne.s32.totalorder %s61, %s64
    %p73 = scmp.eq.s32.totalorder %s14, 1
    %p74 = por %p72, %p73
    %p75 = scmp.ne.s32.totalorder %s64, %s65
    %p76 = scmp.eq.s32.totalorder %s14, 0
    %p77 = por %p75, %p76
    %p78 = scmp.ne.s32.totalorder %s64, %s65
    %p79 = scmp.eq.s32.totalorder %s15, 1
    %p80 = por %p78, %p79
    %p82 = scmp.ne.s32.totalorder %s65, %s81
    %p83 = scmp.eq.s32.totalorder %s15, 0
    %p84 = por %p82, %p83
    %s85 = ssub.s32 %s9, %s16
    %p86 = scmp.eq.s32.totalorder %s85, 0
    %s88 = sadd.s32 %s87, 1
    %s89 = scalar_select %p86, %s87, %s88
    %p92 = pneg %p86
    %p93 = scmp.eq.s32.totalorder %s9, 1
    %p94 = por %p92, %p93
    %p95 = scmp.ne.s32.totalorder %s87, %s90
    %p96 = scmp.eq.s32.totalorder %s9, 0
    %p97 = por %p95, %p96
    %p98 = scmp.ne.s32.totalorder %s87, %s90
    %p99 = scmp.eq.s32.totalorder %s14, 1
    %p100 = por %p98, %p99
    %p101 = scmp.ne.s32.totalorder %s90, %s91
    %p102 = scmp.eq.s32.totalorder %s14, 0
    %p103 = por %p101, %p102
    %p104 = scmp.ne.s32.totalorder %s90, %s91
    %p105 = scmp.eq.s32.totalorder %s15, 1
    %p106 = por %p104, %p105
    %p108 = scmp.ne.s32.totalorder %s91, %s107
    %p109 = scmp.eq.s32.totalorder %s15, 0
    %p110 = por %p108, %p109
    %p111 = scmp.le.s32.totalorder 1, %s9
    %p112 = scmp.lt.s32.totalorder %s9, 3
    %p113 = pnand %p111, %p112
    %p114 = pneg %p113
    // Predicated region
    $region9: #{interpolate.1} parent=5 // pred_check
      _
    $region10: #{interpolate.1} parent=5 // pred_check_branch
      %116 = sbr.rel (%p113) target = $region12
    $region11: #{interpolate.1} parent=5 // pred_region
      %s117 = ssub.s32 %s9, 1
      // Predicated region
      $region13: #{interpolate.1} parent=11 // pred_check
        %p118 = pneg %p30
      $region14: #{interpolate.1} parent=11 // pred_check_branch
        %120 = sbr.rel (%p118) target = $region16
      $region15: #{interpolate.1} parent=11 // pred_region
        _
      $region16: #{interpolate.1} parent=11 // pred_fallthru
        _
      // Predicated region
      $region17: #{interpolate.1} parent=11 // pred_check
        %p121 = pneg %p51
      $region18: #{interpolate.1} parent=11 // pred_check_branch
        %123 = sbr.rel (%p121) target = $region20
      $region19: #{interpolate.1} parent=11 // pred_region
        _
      $region20: #{interpolate.1} parent=11 // pred_fallthru
        _
    $region12: #{interpolate.1} parent=5 // pred_fallthru
      _
    %p124 = scmp.lt.s32.totalorder %s9, 2
    // Predicated region
    $region21: #{interpolate.1} parent=5 // pred_check
      %p125 = pneg %p124
    $region22: #{interpolate.1} parent=5 // pred_check_branch
      %127 = sbr.rel (%p125) target = $region24
    $region23: #{interpolate.1} parent=5 // pred_region
      // Predicated region
      $region25: #{interpolate.1} parent=23 // pred_check
        %p128 = pneg %p71
      $region26: #{interpolate.1} parent=23 // pred_check_branch
        %130 = sbr.rel (%p128) target = $region28
      $region27: #{interpolate.1} parent=23 // pred_region
        %p131 = scmp.lt.s32.totalorder %s9, 1
        %s132 = scalar_select %p131, %s9, 1
        %s133 = smul.addr %s132, 2
        %s134 = smul.addr %s133, 8
        %s135 = scalar_lea.vmem %s2, %s134
      $region28: #{interpolate.1} parent=23 // pred_fallthru
        _
    $region24: #{interpolate.1} parent=5 // pred_fallthru
      _
    %p136 = scmp.le.s32.totalorder 1, %s9
    %p137 = scmp.lt.s32.totalorder %s9, 3
    %p138 = pnand %p136, %p137
    %p139 = pneg %p138
    // Predicated region
    $region29: #{interpolate.1} parent=5 // pred_check
      _
    $region30: #{interpolate.1} parent=5 // pred_check_branch
      %141 = sbr.rel (%p138) target = $region32
    $region31: #{interpolate.1} parent=5 // pred_region
      %s142 = ssub.s32 %s9, 1
      %p143 = pneg %p30
      %p144 = pneg %p27
      %p145 = pneg %p51
      %p146 = pneg %p48
      %p147 = scmp.lt.s32.totalorder %s14, 1
      %s148 = scalar_select %p147, %s14, 1
      %s149 = smul.addr %s148, 2
      %s150 = smul.addr %s149, 8
      %s151 = scalar_lea.vmem %s2, %s150
      %p152 = pneg %p77
      %p153 = pneg %p74
      %p154 = pneg %p103
      %p155 = pneg %p100
      %p156 = scmp.lt.s32.totalorder %s14, 1
      %s157 = scalar_select %p156, %s14, 1
      %s158 = smul.addr %s157, 4
      %s159 = smul.addr %s158, 8
      %s160 = scalar_lea.vmem %s3, %s159
      %p161 = scmp.lt.s32.totalorder %s14, 1
      %s162 = scalar_select %p161, %s14, 1
      %s163 = smul.addr %s162, 2
      %s164 = smul.addr %s163, 8
      %s165 = scalar_lea.vmem %s2, %s164
      %p166 = scmp.lt.s32.totalorder %s14, 1
      %s167 = scalar_select %p166, %s14, 1
      %s168 = smul.addr %s167, 4
      %s169 = smul.addr %s168, 8
      %s170 = scalar_lea.vmem %s3, %s169
      %v171 = vld [vmem:[%s165] sm:$0xff]
      %v172 = vld [vmem:[%s165 + $0x8] sm:$0xff]
      %v173 = vld [vmem:[%s1] sm:$0xff]
      %v174 = vld [vmem:[%s1 + $0x8] sm:$0xff]
      %v175 = vld [vmem:[%s1 + $0x10] sm:$0xff]
      %v176 = vld [vmem:[%s1 + $0x18] sm:$0xff]
      %v177 = vld [vmem:[%s1 + $0x20] sm:$0xff]
      %v178 = vld [vmem:[%s1 + $0x28] sm:$0xff]
      %v179 = vld [vmem:[%s1 + $0x30] sm:$0xff]
      %v180 = vld [vmem:[%s1 + $0x38] sm:$0xff]
      %vm181 = vcmask 523264
      %v183 = vsel %vm181, %v171, 0
      %v186 = vsel %vm181, %v172, 0
      %188 = vmatprep.subr.mxu0 0.0
      %189 = vmatpush1.msra.mxu0 %v173
      %190 = vmatprep.subr.mxu0 0.0
      %191 = vmatpush1.msra.mxu0 %v174
      %192 = vmatprep.subr.mxu0 0.0
      %193 = vmatpush1.msra.mxu0 %v175
      %194 = vmatprep.subr.mxu0 0.0
      %195 = vmatpush1.msra.mxu0 %v176
      %196 = vmatprep.subr.mxu0 0.0
      %197 = vmatpush1.msra.mxu0 %v177
      %198 = vmatprep.subr.mxu0 0.0
      %199 = vmatpush1.msra.mxu0 %v178
      %200 = vmatprep.subr.mxu0 0.0
      %201 = vmatpush1.msra.mxu0 %v179
      %202 = vmatprep.subr.mxu0 0.0
      %203 = vmatpush1.msra.mxu0 %v180
      %204 = vmatprep.subr.mxu0 0.0
      %205 = vmatpush1.msra.mxu0 0.0
      %206 = vmatprep.subr.mxu0 0.0
      %207 = vmatpush1.msra.mxu0 0.0
      %208 = vmatprep.subr.mxu0 0.0
      %209 = vmatpush1.msra.mxu0 0.0
      %210 = vmatprep.subr.mxu0 0.0
      %211 = vmatpush1.msra.mxu0 0.0
      %212 = vmatprep.subr.mxu0 0.0
      %213 = vmatpush1.msra.mxu0 0.0
      %214 = vmatprep.subr.mxu0 0.0
      %215 = vmatpush1.msra.mxu0 0.0
      %216 = vmatprep.subr.mxu0 0.0
      %217 = vmatpush1.msra.mxu0 0.0
      %218 = vmatprep.subr.mxu0 0.0
      %219 = vmatpush1.msra.mxu0 0.0
      %220 = vmatprep.subr.mxu0 0.0
      %221 = vmatpush1.msra.mxu0 0.0
      %222 = vmatprep.subr.mxu0 0.0
      %223 = vmatpush1.msra.mxu0 0.0
      %224 = vmatprep.subr.mxu0 0.0
      %225 = vmatpush1.msra.mxu0 0.0
      %226 = vmatprep.subr.mxu0 0.0
      %227 = vmatpush1.msra.mxu0 0.0
      %228 = vmatprep.subr.mxu0 0.0
      %229 = vmatpush1.msra.mxu0 0.0
      %230 = vmatprep.subr.mxu0 0.0
      %231 = vmatpush1.msra.mxu0 0.0
      %232 = vmatprep.subr.mxu0 0.0
      %233 = vmatpush1.msra.mxu0 0.0
      %234 = vmatprep.subr.mxu0 0.0
      %235 = vmatpush1.msra.mxu0 0.0
      %236 = vmatprep.subr.mxu0 0.0
      %237 = vmatpush1.msra.mxu0 0.0
      %238 = vmatprep.subr.mxu0 0.0
      %239 = vmatpush1.msra.mxu0 0.0
      %240 = vmatprep.subr.mxu0 0.0
      %241 = vmatpush1.msra.mxu0 0.0
      %242 = vmatprep.subr.mxu0 0.0
      %243 = vmatpush1.msra.mxu0 0.0
      %244 = vmatprep.subr.mxu0 0.0
      %245 = vmatpush1.msra.mxu0 0.0
      %246 = vmatprep.subr.mxu0 0.0
      %247 = vmatpush1.msra.mxu0 0.0
      %248 = vmatprep.subr.mxu0 0.0
      %249 = vmatpush1.msra.mxu0 0.0
      %250 = vmatprep.subr.mxu0 0.0
      %251 = vmatpush1.msra.mxu0 0.0
      %252 = vmatprep.mubr.f32.mxu0 0.0
      %253 = vmatmul.mubr.f32.gmra.mrb[0].mxu0 %v183
      %v254 = vpop.f32.mrb[0].mxu0
      %v255 = vadd.f32 0.0, %v254
      %v256 = vpop.f32.mrb[0].mxu0
      %257 = vmatprep.mubr.f32.mxu0 0.0
      %258 = vmatmul.mubr.f32.gmra.mrb[0].mxu0 %v186
      %v259 = vpop.f32.mrb[0].mxu0
      %v260 = vadd.f32 0.0, %v259
      %v261 = vpop.f32.mrb[0].mxu0
      %262 = vdwg.mxu0
      %v263 = vld [vmem:[%s0] sm:$0xff]
      %v264 = vld [vmem:[%s0 + $0x8] sm:$0xff]
      %v265 = vld [vmem:[%s0 + $0x10] sm:$0xff]
      %v266 = vld [vmem:[%s0 + $0x18] sm:$0xff]
      %vm267 = vcmask 130048
      %v269 = vsel %vm267, %v263, 0
      %v272 = vsel %vm267, %v264, 0
      %v275 = vsel %vm267, %v265, 0
      %v278 = vsel %vm267, %v266, 0
      %280 = vmatprep.subr.mxu0 0.0
      %281 = vmatpush1.msra.mxu0 %v255
      %282 = vmatprep.subr.mxu0 0.0
      %283 = vmatpush1.msra.mxu0 %v260
      %284 = vmatprep.subr.mxu0 0.0
      %285 = vmatpush1.msra.mxu0 0.0
      %286 = vmatprep.subr.mxu0 0.0
      %287 = vmatpush1.msra.mxu0 0.0
      %288 = vmatprep.subr.mxu0 0.0
      %289 = vmatpush1.msra.mxu0 0.0
      %290 = vmatprep.subr.mxu0 0.0
      %291 = vmatpush1.msra.mxu0 0.0
      %292 = vmatprep.subr.mxu0 0.0
      %293 = vmatpush1.msra.mxu0 0.0
      %294 = vmatprep.subr.mxu0 0.0
      %295 = vmatpush1.msra.mxu0 0.0
      %296 = vmatprep.subr.mxu0 0.0
      %297 = vmatpush1.msra.mxu0 0.0
      %298 = vmatprep.subr.mxu0 0.0
      %299 = vmatpush1.msra.mxu0 0.0
      %300 = vmatprep.subr.mxu0 0.0
      %301 = vmatpush1.msra.mxu0 0.0
      %302 = vmatprep.subr.mxu0 0.0
      %303 = vmatpush1.msra.mxu0 0.0
      %304 = vmatprep.subr.mxu0 0.0
      %305 = vmatpush1.msra.mxu0 0.0
      %306 = vmatprep.subr.mxu0 0.0
      %307 = vmatpush1.msra.mxu0 0.0
      %308 = vmatprep.subr.mxu0 0.0
      %309 = vmatpush1.msra.mxu0 0.0
      %310 = vmatprep.subr.mxu0 0.0
      %311 = vmatpush1.msra.mxu0 0.0
      %312 = vmatprep.subr.mxu0 0.0
      %313 = vmatpush1.msra.mxu0 0.0
      %314 = vmatprep.subr.mxu0 0.0
      %315 = vmatpush1.msra.mxu0 0.0
      %316 = vmatprep.subr.mxu0 0.0
      %317 = vmatpush1.msra.mxu0 0.0
      %318 = vmatprep.subr.mxu0 0.0
      %319 = vmatpush1.msra.mxu0 0.0
      %320 = vmatprep.subr.mxu0 0.0
      %321 = vmatpush1.msra.mxu0 0.0
      %322 = vmatprep.subr.mxu0 0.0
      %323 = vmatpush1.msra.mxu0 0.0
      %324 = vmatprep.subr.mxu0 0.0
      %325 = vmatpush1.msra.mxu0 0.0
      %326 = vmatprep.subr.mxu0 0.0
      %327 = vmatpush1.msra.mxu0 0.0
      %328 = vmatprep.subr.mxu0 0.0
      %329 = vmatpush1.msra.mxu0 0.0
      %330 = vmatprep.subr.mxu0 0.0
      %331 = vmatpush1.msra.mxu0 0.0
      %332 = vmatprep.subr.mxu0 0.0
      %333 = vmatpush1.msra.mxu0 0.0
      %334 = vmatprep.subr.mxu0 0.0
      %335 = vmatpush1.msra.mxu0 0.0
      %336 = vmatprep.subr.mxu0 0.0
      %337 = vmatpush1.msra.mxu0 0.0
      %338 = vmatprep.subr.mxu0 0.0
      %339 = vmatpush1.msra.mxu0 0.0
      %340 = vmatprep.subr.mxu0 0.0
      %341 = vmatpush1.msra.mxu0 0.0
      %342 = vmatprep.subr.mxu0 0.0
      %343 = vmatpush1.msra.mxu0 0.0
      %344 = vmatprep.mubr.f32.mxu0 0.0
      %345 = vmatmul.mubr.f32.gmra.mrb[0].mxu0 %v269
      %v346 = vpop.f32.mrb[0].mxu0
      %v347 = vadd.f32 0.0, %v346
      %v348 = vpop.f32.mrb[0].mxu0
      %349 = vmatprep.mubr.f32.mxu0 0.0
      %350 = vmatmul.mubr.f32.gmra.mrb[0].mxu0 %v272
      %v351 = vpop.f32.mrb[0].mxu0
      %v352 = vadd.f32 0.0, %v351
      %v353 = vpop.f32.mrb[0].mxu0
      %354 = vmatprep.mubr.f32.mxu0 0.0
      %355 = vmatmul.mubr.f32.gmra.mrb[0].mxu0 %v275
      %v356 = vpop.f32.mrb[0].mxu0
      %v357 = vadd.f32 0.0, %v356
      %v358 = vpop.f32.mrb[0].mxu0
      %359 = vmatprep.mubr.f32.mxu0 0.0
      %360 = vmatmul.mubr.f32.gmra.mrb[0].mxu0 %v278
      %v361 = vpop.f32.mrb[0].mxu0
      %v362 = vadd.f32 0.0, %v361
      %v363 = vpop.f32.mrb[0].mxu0
      %364 = vdwg.mxu0
      %365 = vst [vmem:[%s170] sm:$0xff] %v347
      %366 = vst [vmem:[%s170 + $0x8] sm:$0xff] %v352
      %367 = vst [vmem:[%s170 + $0x10] sm:$0xff] %v357
      %368 = vst [vmem:[%s170 + $0x18] sm:$0xff] %v362
      %p369 = scmp.lt.s32.totalorder %s14, 1
      %s370 = scalar_select %p369, %s14, 1
      %s371 = smul.addr %s370, 4
      %s372 = smul.addr %s371, 8
      %s373 = scalar_lea.vmem %s3, %s372
      // Predicated region
      $region33: #{interpolate.1} parent=31 // pred_check
        %p374 = pneg %p100
      $region34: #{interpolate.1} parent=31 // pred_check_branch
        %376 = sbr.rel (%p374) target = $region36
      $region35: #{interpolate.1} parent=31 // pred_region
        _
      $region36: #{interpolate.1} parent=31 // pred_fallthru
        _
    $region32: #{interpolate.1} parent=5 // pred_fallthru
      _
    %p377 = scmp.le.s32.totalorder 2, %s9
    // Predicated region
    $region37: #{interpolate.1} parent=5 // pred_check
      %p378 = pneg %p377
    $region38: #{interpolate.1} parent=5 // pred_check_branch
      %380 = sbr.rel (%p378) target = $region40
    $region39: #{interpolate.1} parent=5 // pred_region
      %s381 = ssub.s32 %s9, 2
      // Predicated region
      $region41: #{interpolate.1} parent=39 // pred_check
        %p382 = pneg %p106
      $region42: #{interpolate.1} parent=39 // pred_check_branch
        %384 = sbr.rel (%p382) target = $region44
      $region43: #{interpolate.1} parent=39 // pred_region
        %p385 = scmp.lt.s32.totalorder %s15, 1
        %s386 = scalar_select %p385, %s15, 1
        %s387 = smul.addr %s386, 4
        %s388 = smul.addr %s387, 8
        %s389 = scalar_lea.vmem %s3, %s388
      $region44: #{interpolate.1} parent=39 // pred_fallthru
        _
    $region40: #{interpolate.1} parent=5 // pred_fallthru
      _
  $region6: #{interpolate.1} parent=0 // loop_footer
    %s13 = sadd.s32 1, %s9
  $region7: #{interpolate.1} parent=0 // loop_footer_branch
    %8 = sbr.rel target = $region3
  $region8: #{interpolate.1} parent=0 // loop_exit
    _

</llo_original>
